<compile_context>
chip_gen: v6e
topology: v6e:2x2x1
jax: 0.10.0
libtpu: 0.0.40
codegen_flags: <defaults>
</compile_context>

<pallas_src>
import functools
import math

import jax
import jax.numpy as jnp
from jax import lax
from jax.experimental import pallas as pl
from jax.experimental.pallas import tpu as pltpu

_LANES = 128
_SUBLANES = 8


def _cdiv(a, b):
    return -(-a // b)


def _nse_kernel(inp_ref, tgt_ref, err_ref, cnt_ref, *,
                B, F, tb, tf, nb, nf, mask_rows, mask_cols):
    # Grid: (nb, nf); axis 1 (feature tiles) is the reduction axis.
    b = pl.program_id(0)
    k = pl.program_id(1)

    @pl.when(k == 0)
    def _():
        err_ref[...] = jnp.zeros_like(err_ref)
        cnt_ref[...] = jnp.zeros_like(cnt_ref)

    x = inp_ref[...].astype(jnp.float32)          # (tb, tf)
    t = tgt_ref[...].astype(jnp.float32)          # (tb, tf)

    def accumulate(bound_mask):
        mask = jnp.isfinite(t)
        if bound_mask is not None:
            mask = jnp.logical_and(mask, bound_mask)
        # target.where(mask, input) -> (target - input) is exactly 0 where
        # masked; where() also protects against NaN/Inf garbage in the
        # out-of-bounds parts of partial edge tiles.
        diff = jnp.where(mask, t - x, jnp.float32(0.0))
        err_ref[...] += jnp.sum(diff * diff, axis=1, keepdims=True)     # (tb,1)
        cnt_ref[...] += jnp.sum(mask.astype(jnp.float32), axis=1,
                                keepdims=True)                          # (tb,1)

    if not (mask_rows or mask_cols):
        # Fully tile-aligned problem: single lean path, no index masks at all.
        accumulate(None)
    else:
        conds = []
        if mask_cols:
            conds.append(k == nf - 1)
        if mask_rows:
            conds.append(b == nb - 1)
        edge = conds[0] if len(conds) == 1 else jnp.logical_or(*conds)

        @pl.when(jnp.logical_not(edge))
        def _():
            accumulate(None)                      # interior tiles: lean path

        @pl.when(edge)
        def _():
            bm = None
            if mask_cols:
                col = lax.broadcasted_iota(jnp.int32, (tb, tf), 1) + k * tf
                bm = col < F
            if mask_rows:
                row = lax.broadcasted_iota(jnp.int32, (tb, tf), 0) + b * tb
                rm = row < B
                bm = rm if bm is None else jnp.logical_and(bm, rm)
            accumulate(bm)


def nse_loss(inp, tgt, basin_std, *, constant=0.1, block_bytes=4 * 1024 * 1024):
    """NSE* loss. inp/tgt: (B, ...) same shape; basin_std: (B,). Returns scalar."""
    assert inp.shape == tgt.shape
    B = inp.shape[0]
    F = math.prod(inp.shape[1:]) if inp.ndim > 1 else 1

    # Free views; no padding, no data movement.
    inp2 = inp.reshape(B, F)
    tgt2 = tgt.reshape(B, F)

    itemsize = max(jnp.dtype(inp2.dtype).itemsize, jnp.dtype(tgt2.dtype).itemsize)
    max_block_elems = max(block_bytes // itemsize, _SUBLANES * _LANES)

    F128 = _cdiv(F, _LANES) * _LANES          # F rounded up to a lane multiple
    R = F128 // _LANES                        # number of 128-lane groups

    # ---- batch tile ----
    tb = B if B <= _SUBLANES else _SUBLANES   # full dim, or a multiple of 8

    # ---- feature tile ----
    if F128 * tb <= max_block_elems:
        # One feature tile covers all of F; grow tb to amortize per-step
        # overhead for the large-B / small-F case.
        tf = F128
        if B > _SUBLANES:
            tb_max = max(_SUBLANES,
                         (max_block_elems // F128) // _SUBLANES * _SUBLANES)
            tb = min(_cdiv(B, _SUBLANES) * _SUBLANES, tb_max)
    else:
        # Balanced feature tiles (multiple of 128, waste < 128 lanes).
        max_rows = max(1, (max_block_elems // tb) // _LANES)
        nf0 = _cdiv(R, max_rows)
        tf = _cdiv(R, nf0) * _LANES

    nb = _cdiv(B, tb)
    nf = _cdiv(F, tf)

    mask_cols = (nf * tf) > F                 # ragged feature tail
    mask_rows = (nb * tb) > B                 # ragged batch tail

    kernel = functools.partial(
        _nse_kernel, B=B, F=F, tb=tb, tf=tf, nb=nb, nf=nf,
        mask_rows=mask_rows, mask_cols=mask_cols)

    cost = pl.CostEstimate(
        flops=5 * B * F,
        transcendentals=0,
        bytes_accessed=B * F * (jnp.dtype(inp2.dtype).itemsize
                                + jnp.dtype(tgt2.dtype).itemsize) + 2 * B * 4,
    )

    err_acc, cnt_acc = pl.pallas_call(
        kernel,
        out_shape=(
            jax.ShapeDtypeStruct((B, 1), jnp.float32),   # sum of (t-x)^2
            jax.ShapeDtypeStruct((B, 1), jnp.float32),   # count of finite t
        ),
        grid_spec=pltpu.PrefetchScalarGridSpec(
            num_scalar_prefetch=0,
            grid=(nb, nf),
            in_specs=[
                pl.BlockSpec((tb, tf), lambda b, k: (b, k)),
                pl.BlockSpec((tb, tf), lambda b, k: (b, k)),
            ],
            out_specs=[
                pl.BlockSpec((tb, 1), lambda b, k: (b, 0)),
                pl.BlockSpec((tb, 1), lambda b, k: (b, 0)),
            ],
        ),
        compiler_params=pltpu.CompilerParams(
            # Batch axis parallel (megacore on v7x, harmless elsewhere);
            # feature reduction axis last and arbitrary.
            dimension_semantics=("parallel", "arbitrary"),
            vmem_limit_bytes=32 * 1024 * 1024,
        ),
        cost_estimate=cost,
    )(inp2, tgt2)

    # ---- tiny O(B) postamble in plain JAX ----
    err_sum = err_acc[:, 0]
    num_valid = cnt_acc[:, 0]

    std = basin_std.reshape(B).astype(jnp.float32)
    basin_norm = (std + jnp.float32(constant)) ** 2

    weight = 1.0 / (1.0 + jnp.exp(-(num_valid - 100.0) / 20.0))
    batch_err = (err_sum / basin_norm) / num_valid   # NaN if num_valid==0 (as ref)
    return jnp.sum(batch_err * weight) / jnp.sum(weight)


def _reference(inp, tgt, basin_std, constant=0.1):
    # Pure-JAX reference mirroring the PyTorch module exactly.
    mask = jnp.isfinite(tgt)
    red = tuple(range(1, tgt.ndim))
    std = basin_std.reshape((basin_std.shape[0],) + (1,) * (tgt.ndim - 1))
    basin_norm = (std + constant) ** 2
    t = jnp.where(mask, tgt, inp)
    element_err = (t - inp) ** 2 / basin_norm
    num_valid = jnp.sum(mask, axis=red).astype(jnp.float32)
    weight = 1.0 / (1.0 + jnp.exp(-(num_valid - 100.0) / 20.0))
    batch_err = jnp.sum(element_err, axis=red) / num_valid
    return jnp.sum(batch_err * weight) / jnp.sum(weight)


if __name__ == "__main__":
    key = jax.random.PRNGKey(0)
    k1, k2, k3, k4, k5, k6, k7 = jax.random.split(key, 7)

    # Case 1: feature dim is an exact multiple of 128 (fully aligned fast path).
    B, C, H, W = 2, 4, 16, 16
    inp = jax.random.normal(k1, (B, C, H, W), dtype=jnp.float32)
    tgt = jax.random.normal(k2, (B, C, H, W), dtype=jnp.float32)
    tgt = tgt.at[0, 0, 0, :5].set(jnp.nan)          # masked elements
    tgt = tgt.at[1, 1, 2, 3].set(jnp.inf)
    basin_std = jax.random.uniform(k3, (B,), dtype=jnp.float32,
                                   minval=0.5, maxval=2.0)

    loss = jax.block_until_ready(nse_loss(inp, tgt, basin_std))
    ref = _reference(inp, tgt, basin_std)
    assert jnp.allclose(loss, ref, rtol=1e-5, atol=1e-6), (loss, ref)

    # Case 2: ragged feature dim (exercises the in-kernel column masking).
    B2, C2, H2, W2 = 2, 3, 7, 5
    inp2 = jax.random.normal(k4, (B2, C2, H2, W2), dtype=jnp.float32)
    tgt2 = jax.random.normal(k5, (B2, C2, H2, W2), dtype=jnp.float32)
    tgt2 = tgt2.at[0, 1, 3, 2].set(jnp.nan)
    basin_std2 = jnp.array([0.7, 1.3], dtype=jnp.float32)

    loss2 = jax.block_until_ready(nse_loss(inp2, tgt2, basin_std2))
    ref2 = _reference(inp2, tgt2, basin_std2)
    assert jnp.allclose(loss2, ref2, rtol=1e-5, atol=1e-6), (loss2, ref2)

    # Case 3: ragged batch AND ragged features with a multi-tile reduction grid
    # (tiny block budget forces nb=2, nf=3 and both bound masks).
    B3, T3, D3 = 10, 7, 100
    inp3 = jax.random.normal(k6, (B3, T3, D3), dtype=jnp.float32)
    tgt3 = jax.random.normal(k7, (B3, T3, D3), dtype=jnp.float32)
    tgt3 = tgt3.at[3, 2, :10].set(jnp.nan)
    tgt3 = tgt3.at[9, 0, 0].set(-jnp.inf)
    basin_std3 = jnp.linspace(0.5, 2.0, B3, dtype=jnp.float32)

    loss3 = jax.block_until_ready(
        nse_loss(inp3, tgt3, basin_std3, block_bytes=8192))
    ref3 = _reference(inp3, tgt3, basin_std3)
    assert jnp.allclose(loss3, ref3, rtol=1e-5, atol=1e-6), (loss3, ref3)

    print("KERNEL_OK")
</pallas_src>

<mosaic_0001>
module attributes {stable_mosaic.version = 11 : i64} {
  func.func @_nse_kernel(%arg0: i32, %arg1: i32, %arg2: memref<2x1024xf32, #tpu.memory_space<vmem>>, %arg3: memref<2x1024xf32, #tpu.memory_space<vmem>>, %arg4: memref<2x1xf32, #tpu.memory_space<vmem>>, %arg5: memref<2x1xf32, #tpu.memory_space<vmem>>) attributes {dimension_semantics = [#tpu.dimension_semantics<parallel>, #tpu.dimension_semantics<arbitrary>], iteration_bounds = array<i64: 1, 1>, scalar_prefetch = 0 : i64, scratch_operands = 0 : i64, tpu.core_type = #tpu.core_type<tc>, window_params = [{transform_indices = @transform_0, window_bounds = array<i64: 2, 1024>}, {transform_indices = @transform_1, window_bounds = array<i64: 2, 1024>}, {transform_indices = @transform_2, window_bounds = array<i64: 2, 1>}, {transform_indices = @transform_3, window_bounds = array<i64: 2, 1>}]} {
    %c0_i32 = arith.constant 0 : i32
    %0 = arith.cmpi eq, %arg1, %c0_i32 : i32
    %1 = arith.extui %0 : i1 to i32
    %c0_i32_0 = arith.constant 0 : i32
    %2 = arith.cmpi ne, %1, %c0_i32_0 : i32
    scf.if %2 {
      %cst_15 = arith.constant 0.000000e+00 : f32
      %23 = vector.broadcast %cst_15 : f32 to vector<2x1xf32>
      %c0_16 = arith.constant 0 : index
      %c0_17 = arith.constant 0 : index
      %24 = vector.load %arg4[%c0_16, %c0_17] : memref<2x1xf32, #tpu.memory_space<vmem>>, vector<2x1xf32>
      tpu.vector_store %arg4[%c0_16, %c0_17], %23 {strides = array<i32>} : memref<2x1xf32, #tpu.memory_space<vmem>>, vector<2x1xf32>,
      %cst_18 = arith.constant 0.000000e+00 : f32
      %25 = vector.broadcast %cst_18 : f32 to vector<2x1xf32>
      %c0_19 = arith.constant 0 : index
      %c0_20 = arith.constant 0 : index
      %26 = vector.load %arg5[%c0_19, %c0_20] : memref<2x1xf32, #tpu.memory_space<vmem>>, vector<2x1xf32>
      tpu.vector_store %arg5[%c0_19, %c0_20], %25 {strides = array<i32>} : memref<2x1xf32, #tpu.memory_space<vmem>>, vector<2x1xf32>,
    } else {
    }
    %c0 = arith.constant 0 : index
    %c0_1 = arith.constant 0 : index
    %3 = vector.load %arg2[%c0, %c0_1] : memref<2x1024xf32, #tpu.memory_space<vmem>>, vector<2x1024xf32>
    %c0_2 = arith.constant 0 : index
    %c0_3 = arith.constant 0 : index
    %4 = vector.load %arg3[%c0_2, %c0_3] : memref<2x1024xf32, #tpu.memory_space<vmem>>, vector<2x1024xf32>
    %5 = tpu.weird %4 : vector<2x1024xf32> -> vector<2x1024xi1>
    %cst = arith.constant dense<true> : vector<2x1024xi1>
    %6 = arith.xori %5, %cst : vector<2x1024xi1>
    %7 = arith.subf %4, %3 : vector<2x1024xf32>
    %cst_4 = arith.constant 0.000000e+00 : f32
    %8 = vector.broadcast %cst_4 : f32 to vector<2x1024xf32>
    %9 = arith.select %6, %7, %8 : vector<2x1024xi1>, vector<2x1024xf32>
    %c0_5 = arith.constant 0 : index
    %c0_6 = arith.constant 0 : index
    %10 = vector.load %arg4[%c0_5, %c0_6] : memref<2x1xf32, #tpu.memory_space<vmem>>, vector<2x1xf32>
    %11 = arith.mulf %9, %9 : vector<2x1024xf32>
    %cst_7 = arith.constant dense<0.000000e+00> : vector<2xf32>
    %12 = vector.multi_reduction <add>, %11, %cst_7 [1] : vector<2x1024xf32> to vector<2xf32>
    %13 = vector.shape_cast %12 : vector<2xf32> to vector<2x1xf32>
    %14 = arith.addf %10, %13 : vector<2x1xf32>
    %c0_8 = arith.constant 0 : index
    %c0_9 = arith.constant 0 : index
    %15 = vector.load %arg4[%c0_8, %c0_9] : memref<2x1xf32, #tpu.memory_space<vmem>>, vector<2x1xf32>
    tpu.vector_store %arg4[%c0_8, %c0_9], %14 {strides = array<i32>} : memref<2x1xf32, #tpu.memory_space<vmem>>, vector<2x1xf32>,
    %c0_10 = arith.constant 0 : index
    %c0_11 = arith.constant 0 : index
    %16 = vector.load %arg5[%c0_10, %c0_11] : memref<2x1xf32, #tpu.memory_space<vmem>>, vector<2x1xf32>
    %17 = arith.extui %6 : vector<2x1024xi1> to vector<2x1024xi32>
    %18 = arith.sitofp %17 : vector<2x1024xi32> to vector<2x1024xf32>
    %cst_12 = arith.constant dense<0.000000e+00> : vector<2xf32>
    %19 = vector.multi_reduction <add>, %18, %cst_12 [1] : vector<2x1024xf32> to vector<2xf32>
    %20 = vector.shape_cast %19 : vector<2xf32> to vector<2x1xf32>
    %21 = arith.addf %16, %20 : vector<2x1xf32>
    %c0_13 = arith.constant 0 : index
    %c0_14 = arith.constant 0 : index
    %22 = vector.load %arg5[%c0_13, %c0_14] : memref<2x1xf32, #tpu.memory_space<vmem>>, vector<2x1xf32>
    tpu.vector_store %arg5[%c0_13, %c0_14], %21 {strides = array<i32>} : memref<2x1xf32, #tpu.memory_space<vmem>>, vector<2x1xf32>,
    return
  }
  func.func @transform_0(%arg0: i32, %arg1: i32) -> (i32, i32) {
    %c0_i32 = arith.constant 0 : i32
    return %arg0, %arg1 : i32, i32
  }
  func.func @transform_1(%arg0: i32, %arg1: i32) -> (i32, i32) {
    %c0_i32 = arith.constant 0 : i32
    return %arg0, %arg1 : i32, i32
  }
  func.func @transform_2(%arg0: i32, %arg1: i32) -> (i32, i32) {
    %c0_i32 = arith.constant 0 : i32
    %c0_i32_0 = arith.constant 0 : i32
    return %arg0, %c0_i32 : i32, i32
  }
  func.func @transform_3(%arg0: i32, %arg1: i32) -> (i32, i32) {
    %c0_i32 = arith.constant 0 : i32
    %c0_i32_0 = arith.constant 0 : i32
    return %arg0, %c0_i32 : i32, i32
  }
}

</mosaic_0001>

<llo_original>
// kernel: tpu_custom_call.1
$region0: #{tpu_custom_call.1}
  #allocation0 [shape = 'u32[]', space=smem, size = 0x4, offset = 0x4, fixed_abs, tag = 'smem constant byte address 0x4 - core index']
  #allocation1 [shape = 'u32[144,128]{1,0:T(1,128)}', space=vmem, size = 0x12000, scoped, tag = 'internal scratch']
  %s0 = inlined_call_operand.hbm [shape: f32[2,1024], index: 0, kind: input, shape index: {}]
  %s1 = inlined_call_operand.hbm [shape: f32[2,1024], index: 1, kind: input, shape index: {}]
  %s2 = inlined_call_operand.vmem [shape: f32[2,1], index: 2, kind: output, shape index: {0}]
  %s3 = inlined_call_operand.vmem [shape: f32[2,1], index: 3, kind: output, shape index: {1}]
  %4 = xla_tuple %s2, %s3
  %s5 = sld [smem:[#allocation0]]
  $region38: #{tpu_custom_call.1} parent=0
    _
  %s7 = ssub.s32 1, %s5
  %s8 = scalar_select 0, %s7, %s5
  $region1: #{tpu_custom_call.1} parent=0
    #allocation2 [shape = 'u8[8192]{0}', space=vmem, size = 0x2000, scoped, tag = 'input window, operand 0, single buffered']
    #allocation3 [shape = 's32[1]{0}', space=sflag, size = 0x4, scoped, tag = 'scoped memory for tpu_custom_call.1']
    #allocation4 [shape = 'u8[8192]{0}', space=vmem, size = 0x2000, scoped, tag = 'input window, operand 1, single buffered']
    #allocation5 [shape = 's32[1]{0}', space=sflag, size = 0x4, scoped, tag = 'scoped memory for tpu_custom_call.1']
    %9 = vsyncpa [#allocation3], 0
    %10 = vsyncpa [#allocation5], 0
    // Predicated region
    $region2: #{tpu_custom_call.1} parent=1 // pred_check
      _
    $region3: #{tpu_custom_call.1} parent=1 // pred_check_branch
      %12 = sbr.rel (0) target = $region5
    $region4: #{tpu_custom_call.1} parent=1 // pred_region
      %s14 = ssub.s32 256, 256
      %15 = vsyncadd [#allocation3], %s14
      %s17 = sshll.u32 [#allocation2], 4
      %s18 = int_to_ptr.vmem [resolvable:$true] %s17
      %20 = dma.hbm_to_vmem [thread:$0]  %s0, 256, %s18, [#allocation3]
    $region5: #{tpu_custom_call.1} parent=1 // pred_fallthru
      _
    // Predicated region
    $region6: #{tpu_custom_call.1} parent=1 // pred_check
      _
    $region7: #{tpu_custom_call.1} parent=1 // pred_check_branch
      %22 = sbr.rel (0) target = $region9
    $region8: #{tpu_custom_call.1} parent=1 // pred_region
      %s24 = ssub.s32 256, 256
      %25 = vsyncadd [#allocation5], %s24
      %s27 = sshll.u32 [#allocation4], 4
      %s28 = int_to_ptr.vmem [resolvable:$true] %s27
      %30 = dma.hbm_to_vmem [thread:$0]  %s1, 256, %s28, [#allocation5]
    $region9: #{tpu_custom_call.1} parent=1 // pred_fallthru
      _
    // Predicated region
    $region10: #{tpu_custom_call.1} parent=1 // pred_check
      _
    $region11: #{tpu_custom_call.1} parent=1 // pred_check_branch
      %32 = sbr.rel (0) target = $region13
    $region12: #{tpu_custom_call.1} parent=1 // pred_region
      %33 = dma.done [#allocation3], 256
    $region13: #{tpu_custom_call.1} parent=1 // pred_fallthru
      _
    // Predicated region
    $region14: #{tpu_custom_call.1} parent=1 // pred_check
      _
    $region15: #{tpu_custom_call.1} parent=1 // pred_check_branch
      %35 = sbr.rel (0) target = $region17
    $region16: #{tpu_custom_call.1} parent=1 // pred_region
      %36 = dma.done [#allocation5], 256
    $region17: #{tpu_custom_call.1} parent=1 // pred_fallthru
      _
    %p37 = scmp.eq.s32.totalorder 0, 0
    // Predicated region
    $region18: #{tpu_custom_call.1} parent=1 // pred_check
      %p38 = pneg %p37
    $region19: #{tpu_custom_call.1} parent=1 // pred_check_branch
      %40 = sbr.rel (%p38) target = $region21
    $region20: #{tpu_custom_call.1} parent=1 // pred_region
      %vm41 = vcmask 1024
      %42 = vst.msk [vmem:[%s2] sm:$0x3] %vm41, 0.0
      %43 = vst.msk [vmem:[%s3] sm:$0x3] %vm41, 0.0
    $region21: #{tpu_custom_call.1} parent=1 // pred_fallthru
      _
    %v44 = vld [vmem:[#allocation2] sm:$0xff]
    %v45 = vld [vmem:[#allocation2 + $0x8] sm:$0xff]
    %v46 = vld [vmem:[#allocation4] sm:$0xff]
    %v47 = vld [vmem:[#allocation4 + $0x8] sm:$0xff]
    %vm48 = vweird.f32 %v46
    %vm49 = vweird.f32 %v47
    %vm50 = vmxor %vm48, 1
    %vm51 = vmxor %vm49, 1
    %v52 = vsub.f32 %v46, %v44
    %v53 = vsub.f32 %v47, %v45
    %v54 = vsel %vm50, %v52, 0.0
    %v55 = vsel %vm51, %v53, 0.0
    %v56 = vld [vmem:[%s2] sm:$0x3]
    %v57 = vmul.f32 %v54, %v54
    %v58 = vmul.f32 %v55, %v55
    %v61 = vcombine.high %v57, %v57
    %v63 = vunpack.c.l.s4 1983009808
    %v64 = vunpack.c.0.s8 %v63
    %v65 = vlaneseq
    %v66 = vshrl.u32 %v65, 7
    %v67 = vsub.s32 %v64, %v66
    %v68 = vrot.slane %v57, %v67
    %v70 = vunpack.c.l.s4 1983009808
    %v71 = vunpack.c.0.s8 %v70
    %v72 = vlaneseq
    %v73 = vshrl.u32 %v72, 7
    %v74 = vsub.s32 %v71, %v73
    %v75 = vrot.slane %v61, %v74
    %v76 = vcombine.high %v68, %v68
    %v77 = vcombine.high %v75, %v75
    %v78 = vcombine.high %v58, %v58
    %v80 = vunpack.c.l.s4 1983009808
    %v81 = vunpack.c.0.s8 %v80
    %v82 = vlaneseq
    %v83 = vshrl.u32 %v82, 7
    %v84 = vsub.s32 %v81, %v83
    %v85 = vrot.slane %v58, %v84
    %v87 = vunpack.c.l.s4 1983009808
    %v88 = vunpack.c.0.s8 %v87
    %v89 = vlaneseq
    %v90 = vshrl.u32 %v89, 7
    %v91 = vsub.s32 %v88, %v90
    %v92 = vrot.slane %v78, %v91
    %v93 = vcombine.high %v85, %v85
    %v94 = vcombine.high %v92, %v92
    %vm103 = vcmask 1041408
    %v104 = vsel %vm103, %v68, 0.0
    %v105 = vsel %vm103, %v76, 0.0
    %v106 = vadd.f32 %v104, %v105
    %v107 = vsel %vm103, %v75, 0.0
    %v108 = vadd.f32 %v106, %v107
    %v109 = vsel %vm103, %v77, 0.0
    %v110 = vadd.f32 %v108, %v109
    %v111 = vsel %vm103, %v85, 0.0
    %v112 = vadd.f32 %v110, %v111
    %v113 = vsel %vm103, %v93, 0.0
    %v114 = vadd.f32 %v112, %v113
    %v115 = vsel %vm103, %v92, 0.0
    %v116 = vadd.f32 %v114, %v115
    %v117 = vsel %vm103, %v94, 0.0
    %v118 = vadd.f32 %v116, %v117
    %119 = vadd.xlane.f32.xlu0 %v118
    %v120 = vpop.xlane.xlu0 %119
    %v121 = vadd.f32 %v56, %v120
    %vm122 = vcmask 1024
    %123 = vst.msk [vmem:[%s2] sm:$0x3] %vm122, %v121
    %v124 = vld [vmem:[%s3] sm:$0x3]
    %v125 = vsel %vm50, 1, 0
    %v126 = vsel %vm51, 1, 0
    %v127 = vcvt.s32.f32 %v125
    %v128 = vcvt.s32.f32 %v126
    %v131 = vcombine.high %v127, %v127
    %v133 = vunpack.c.l.s4 1983009808
    %v134 = vunpack.c.0.s8 %v133
    %v135 = vlaneseq
    %v136 = vshrl.u32 %v135, 7
    %v137 = vsub.s32 %v134, %v136
    %v138 = vrot.slane %v127, %v137
    %v140 = vunpack.c.l.s4 1983009808
    %v141 = vunpack.c.0.s8 %v140
    %v142 = vlaneseq
    %v143 = vshrl.u32 %v142, 7
    %v144 = vsub.s32 %v141, %v143
    %v145 = vrot.slane %v131, %v144
    %v146 = vcombine.high %v138, %v138
    %v147 = vcombine.high %v145, %v145
    %v148 = vcombine.high %v128, %v128
    %v150 = vunpack.c.l.s4 1983009808
    %v151 = vunpack.c.0.s8 %v150
    %v152 = vlaneseq
    %v153 = vshrl.u32 %v152, 7
    %v154 = vsub.s32 %v151, %v153
    %v155 = vrot.slane %v128, %v154
    %v157 = vunpack.c.l.s4 1983009808
    %v158 = vunpack.c.0.s8 %v157
    %v159 = vlaneseq
    %v160 = vshrl.u32 %v159, 7
    %v161 = vsub.s32 %v158, %v160
    %v162 = vrot.slane %v148, %v161
    %v163 = vcombine.high %v155, %v155
    %v164 = vcombine.high %v162, %v162
    %v173 = vsel %vm103, %v138, 0.0
    %v174 = vsel %vm103, %v146, 0.0
    %v175 = vadd.f32 %v173, %v174
    %v176 = vsel %vm103, %v145, 0.0
    %v177 = vadd.f32 %v175, %v176
    %v178 = vsel %vm103, %v147, 0.0
    %v179 = vadd.f32 %v177, %v178
    %v180 = vsel %vm103, %v155, 0.0
    %v181 = vadd.f32 %v179, %v180
    %v182 = vsel %vm103, %v163, 0.0
    %v183 = vadd.f32 %v181, %v182
    %v184 = vsel %vm103, %v162, 0.0
    %v185 = vadd.f32 %v183, %v184
    %v186 = vsel %vm103, %v164, 0.0
    %v187 = vadd.f32 %v185, %v186
    %188 = vadd.xlane.f32.xlu0 %v187
    %v189 = vpop.xlane.xlu0 %188
    %v190 = vadd.f32 %v124, %v189
    %191 = vst.msk [vmem:[%s3] sm:$0x3] %vm122, %v190
    // Predicated region
    $region22: #{tpu_custom_call.1} parent=1 // pred_check
      _
    $region23: #{tpu_custom_call.1} parent=1 // pred_check_branch
      %193 = sbr.rel (0) target = $region25
    $region24: #{tpu_custom_call.1} parent=1 // pred_region
      _
    $region25: #{tpu_custom_call.1} parent=1 // pred_fallthru
      _
    // Predicated region
    $region26: #{tpu_custom_call.1} parent=1 // pred_check
      _
    $region27: #{tpu_custom_call.1} parent=1 // pred_check_branch
      %195 = sbr.rel (0) target = $region29
    $region28: #{tpu_custom_call.1} parent=1 // pred_region
      _
    $region29: #{tpu_custom_call.1} parent=1 // pred_fallthru
      _
    // Predicated region
    $region30: #{tpu_custom_call.1} parent=1 // pred_check
      _
    $region31: #{tpu_custom_call.1} parent=1 // pred_check_branch
      %197 = sbr.rel (0) target = $region33
    $region32: #{tpu_custom_call.1} parent=1 // pred_region
      _
    $region33: #{tpu_custom_call.1} parent=1 // pred_fallthru
      _
    // Predicated region
    $region34: #{tpu_custom_call.1} parent=1 // pred_check
      _
    $region35: #{tpu_custom_call.1} parent=1 // pred_check_branch
      %199 = sbr.rel (0) target = $region37
    $region36: #{tpu_custom_call.1} parent=1 // pred_region
      _
    $region37: #{tpu_custom_call.1} parent=1 // pred_fallthru
      _
    %200 = vsyncpa [#allocation3], 1
    %201 = vsyncpa [#allocation5], 1

</llo_original>
